<compile_context>
chip_gen: v7x
topology: tpu7x:2x2x1
jax: 0.10.0
libtpu: 0.0.40
codegen_flags: <defaults>
</compile_context>

<pallas_src>
import functools
import numpy as np
import jax
import jax.numpy as jnp
from jax.experimental import pallas as pl
from jax.experimental.pallas import tpu as pltpu

# HungarianMatcher.__init__ defaults
COST_MASK = 1.0
COST_DICE = 0.05
COST_FEATURE = 1.0
ALPHA = 0.25
GAMMA = 2.0   # == 2 -> explicit square
EPS = 1e-8


def _cost_kernel(om_ref, tm_ref, oc_ref, tct_ref, c_ref,
                 acc_dot, acc_neg, acc_prob, *, hw, n):
    """One (batch, hw-tile) grid step.

    om_ref : (1, N, THW)   f32 mask logits tile
    tm_ref : (1, Mpad, THW) bf16 binary target-mask tile
    oc_ref : (1, N, D)     f32 pred clip features
    tct_ref: (1, D, Mpad)  f32 target clip features (transposed, zero-padded)
    c_ref  : (1, N, Mpad)  f32 cost matrix (written only at last hw step)
    acc_dot: (2N+1, Mpad)  f32  rows [0,N): focal_diff@tm, [N,2N): prob@tm, 2N: tm col-sums
    acc_neg: (N, 1)  f32   running sum of focal_neg over HW
    acc_prob:(N, 1)  f32   running sum of prob over HW
    """
    k = pl.program_id(1)
    nk = pl.num_programs(1)

    @pl.when(k == 0)
    def _init():
        acc_dot[...] = jnp.zeros_like(acc_dot)
        acc_neg[...] = jnp.zeros_like(acc_neg)
        acc_prob[...] = jnp.zeros_like(acc_prob)

    om = om_ref[0]                       # (N, THW) f32
    tm = tm_ref[0]                       # (Mpad, THW) bf16

    # Shared exponential: one exp(-|x|) feeds both sigmoid and the stable softplus.
    t = jnp.exp(-jnp.abs(om))
    softplus_abs = jnp.log1p(t)                         # log(1 + exp(-|x|))
    inv1pt = 1.0 / (1.0 + t)
    prob = jnp.where(om >= 0.0, inv1pt, t * inv1pt)     # sigmoid(om)
    one_m_prob = 1.0 - prob

    # Stable BCE-with-logits: target=1 -> max(x,0)-x+sp ; target=0 -> max(x,0)+sp
    relu_om = jnp.maximum(om, 0.0)
    bce_pos = relu_om - om + softplus_abs
    bce_neg = relu_om + softplus_abs
    focal_pos = (one_m_prob * one_m_prob) * bce_pos * ALPHA          # gamma=2 -> square
    focal_neg = (prob * prob) * bce_neg * (1.0 - ALPHA)
    focal_diff = focal_pos - focal_neg   # fp@tm + fn@(1-tm) == (fp-fn)@tm + rowsum(fn)

    # Single fused contraction over this HW tile (no explicit transpose: contract last dims).
    ones_row = jnp.ones((1, om.shape[1]), dtype=jnp.float32)
    stacked = jnp.concatenate([focal_diff, prob, ones_row], axis=0).astype(jnp.bfloat16)
    acc_dot[...] += jax.lax.dot_general(
        stacked, tm,
        dimension_numbers=(((1,), (1,)), ((), ())),
        preferred_element_type=jnp.float32)              # (2N+1, Mpad) f32 accumulate

    # Row sums go to the (idle) XLU slot; accumulated exactly in f32.
    acc_neg[...] += focal_neg.sum(axis=-1, keepdims=True)
    acc_prob[...] += prob.sum(axis=-1, keepdims=True)

    @pl.when(k == nk - 1)
    def _finalize():
        focal_part = acc_dot[0:n, :]             # (N, Mpad)
        prob_dot = acc_dot[n:2 * n, :]           # (N, Mpad)
        tm_sum = acc_dot[2 * n:2 * n + 1, :]     # (1, Mpad)  (exact: f32 MXU accumulation)

        cost_mask = (focal_part + acc_neg[...]) / hw

        numerator = 2.0 * prob_dot
        denominator = acc_prob[...] + tm_sum
        cost_dice = 1.0 - (numerator + 1.0) / (denominator + 1.0)

        oc = oc_ref[0]                           # (N, D)
        tct = tct_ref[0]                         # (D, Mpad)
        oc_inv = 1.0 / jnp.maximum(jnp.sqrt((oc * oc).sum(-1, keepdims=True)), EPS)
        tc_inv = 1.0 / jnp.maximum(jnp.sqrt((tct * tct).sum(0, keepdims=True)), EPS)
        cos_sim = jnp.dot(oc * oc_inv, tct * tc_inv,
                          preferred_element_type=jnp.float32)        # (N, Mpad)
        # L1 with M (=128-padded) on the lane axis; reduce over D along sublanes.
        l1 = jnp.abs(oc[:, :, None] - tct[None, :, :]).sum(axis=1) * (1.0 / oc.shape[1])
        cost_clip = 1.0 - cos_sim + l1

        c = COST_MASK * cost_mask + COST_FEATURE * cost_clip + COST_DICE * cost_dice
        c_ref[0] = c.astype(c_ref.dtype)


def _pick_hw_tile(hw, max_tile=4096):
    """Largest 128-multiple divisor of hw <= max_tile (or hw itself if small / no divisor)."""
    if hw <= max_tile:
        return hw
    best = 0
    for t in range(128, max_tile + 1, 128):
        if hw % t == 0:
            best = t
    return best if best else hw


def compute_cost_matrices(out_mask, tgt_mask_bf16, out_clip, tgt_clip_t):
    """out_mask (B,N,HW) f32, tgt_mask_bf16 (B,Mpad,HW) bf16, out_clip (B,N,D) f32,
    tgt_clip_t (B,D,Mpad) f32  ->  (B,N,Mpad) f32 cost matrix."""
    B, N, HW = out_mask.shape
    Mpad = tgt_mask_bf16.shape[1]
    D = out_clip.shape[2]
    thw = _pick_hw_tile(HW)
    nk = HW // thw
    kernel = functools.partial(_cost_kernel, hw=float(HW), n=N)
    grid_spec = pltpu.PrefetchScalarGridSpec(
        num_scalar_prefetch=0,
        grid=(B, nk),
        in_specs=[
            pl.BlockSpec((1, N, thw), lambda b, k: (b, 0, k)),
            pl.BlockSpec((1, Mpad, thw), lambda b, k: (b, 0, k)),
            pl.BlockSpec((1, N, D), lambda b, k: (b, 0, 0)),
            pl.BlockSpec((1, D, Mpad), lambda b, k: (b, 0, 0)),
        ],
        out_specs=pl.BlockSpec((1, N, Mpad), lambda b, k: (b, 0, 0)),
        scratch_shapes=[
            pltpu.VMEM((2 * N + 1, Mpad), jnp.float32),
            pltpu.VMEM((N, 1), jnp.float32),
            pltpu.VMEM((N, 1), jnp.float32),
        ],
    )
    return pl.pallas_call(
        kernel,
        out_shape=jax.ShapeDtypeStruct((B, N, Mpad), jnp.float32),
        grid_spec=grid_spec,
        compiler_params=pltpu.CompilerParams(
            dimension_semantics=("parallel", "arbitrary"),
            vmem_limit_bytes=64 * 1024 * 1024,
        ),
    )(out_mask, tgt_mask_bf16, out_clip, tgt_clip_t)


def nearest_resize(x, out_h, out_w):
    """PyTorch F.interpolate(mode='nearest') semantics: src = floor(dst * src/dst). x: (..., Hs, Ws)."""
    hs, ws = x.shape[-2], x.shape[-1]
    rows = (jnp.arange(out_h) * hs) // out_h
    cols = (jnp.arange(out_w) * ws) // out_w
    return x[..., rows, :][..., :, cols]


def _pad_axis(x, axis, target):
    pad = target - x.shape[axis]
    if pad == 0:
        return x
    widths = [(0, 0)] * x.ndim
    widths[axis] = (0, pad)
    return jnp.pad(x, widths)


def _ref_cost(out_mask, tgt_mask, out_clip, tgt_clip):
    """Pure-JAX reference for one batch element (same math as PyTorch module)."""
    hw = out_mask.shape[1]
    prob = jax.nn.sigmoid(out_mask)
    sp_abs = jnp.log1p(jnp.exp(-jnp.abs(out_mask)))
    bce_pos = jnp.maximum(out_mask, 0.0) - out_mask + sp_abs
    bce_neg = jnp.maximum(out_mask, 0.0) + sp_abs
    focal_pos = ((1.0 - prob) ** GAMMA) * bce_pos * ALPHA
    focal_neg = (prob ** GAMMA) * bce_neg * (1.0 - ALPHA)
    cost_mask = (focal_pos @ tgt_mask.T + focal_neg @ (1.0 - tgt_mask).T) / hw
    num = 2.0 * prob @ tgt_mask.T
    den = prob.sum(-1)[:, None] + tgt_mask.sum(-1)[None, :]
    cost_dice = 1.0 - (num + 1.0) / (den + 1.0)
    oc_n = out_clip / jnp.maximum(jnp.linalg.norm(out_clip, axis=-1, keepdims=True), EPS)
    tc_n = tgt_clip / jnp.maximum(jnp.linalg.norm(tgt_clip, axis=-1, keepdims=True), EPS)
    cost_clip = 1.0 - oc_n @ tc_n.T + jnp.abs(out_clip[:, None, :] - tgt_clip[None, :, :]).mean(-1)
    return COST_MASK * cost_mask + COST_FEATURE * cost_clip + COST_DICE * cost_dice


def linear_sum_assignment_host(C):
    """Hungarian assignment on the cost matrix (host-side, no Pallas equivalent)."""
    try:
        from scipy.optimize import linear_sum_assignment
        return linear_sum_assignment(C)
    except Exception:
        # TODO(synk): Hungarian (linear_sum_assignment) is a sequential CPU algorithm with no
        # clean Pallas equivalent; fall back to greedy matching if scipy is unavailable.
        C = np.array(C, copy=True)
        n, m = C.shape
        rows, cols = [], []
        for _ in range(min(n, m)):
            i, j = np.unravel_index(np.argmin(C), C.shape)
            rows.append(i); cols.append(j)
            C[i, :] = np.inf; C[:, j] = np.inf
        order = np.argsort(rows)
        return np.asarray(rows)[order], np.asarray(cols)[order]


def hungarian_matcher_forward(pred_masks, pred_clip, tgt_masks, tgt_clip):
    """pred_masks (B,N,H,W), pred_clip (B,N,D), tgt_masks (B,M,Ht,Wt), tgt_clip (B,M,D)."""
    B, N, H, W = pred_masks.shape
    M = tgt_masks.shape[1]
    HW = H * W
    Mpad = ((M + 127) // 128) * 128                         # lane-dense output / MXU-friendly N dim

    tgt_resized = nearest_resize(tgt_masks, H, W)            # glue (nearest interpolate)
    out_mask = pred_masks.reshape(B, N, HW).astype(jnp.float32)
    tgt_mask = _pad_axis(tgt_resized.reshape(B, M, HW).astype(jnp.bfloat16), 1, Mpad)  # binary -> exact bf16
    out_clip = pred_clip.astype(jnp.float32)
    tgt_clip_t = _pad_axis(jnp.transpose(tgt_clip.astype(jnp.float32), (0, 2, 1)), 2, Mpad)  # (B, D, Mpad)

    C_pad = compute_cost_matrices(out_mask, tgt_mask, out_clip, tgt_clip_t)
    C = jax.block_until_ready(C_pad[:, :, :M])
    indices = [linear_sum_assignment_host(np.asarray(C[b])) for b in range(B)]
    return C, [(np.asarray(i, dtype=np.int64), np.asarray(j, dtype=np.int64)) for i, j in indices]


if __name__ == "__main__":
    key = jax.random.PRNGKey(0)
    B, N, M, H, W, D = 2, 8, 8, 16, 16, 32   # num_queries=8, num targets=8, mask 16x16, clip dim 32
    Ht, Wt = 32, 32                           # target masks at higher res -> nearest downsample
    k1, k2, k3, k4 = jax.random.split(key, 4)
    pred_masks = jax.random.normal(k1, (B, N, H, W), jnp.float32)
    pred_clip = jax.random.normal(k2, (B, N, D), jnp.float32)
    tgt_masks = (jax.random.uniform(k3, (B, M, Ht, Wt)) > 0.5).astype(jnp.float32)
    tgt_clip = jax.random.normal(k4, (B, M, D), jnp.float32)

    C, indices = hungarian_matcher_forward(pred_masks, pred_clip, tgt_masks, tgt_clip)

    # Sanity check against pure-JAX reference
    tgt_rs = nearest_resize(tgt_masks, H, W)
    for b in range(B):
        ref = _ref_cost(pred_masks[b].reshape(N, H * W), tgt_rs[b].reshape(M, H * W),
                        pred_clip[b], tgt_clip[b])
        np.testing.assert_allclose(np.asarray(C[b]), np.asarray(ref), rtol=2e-2, atol=2e-2)

    jax.block_until_ready(C)
    print("KERNEL_OK")
</pallas_src>

<mosaic_0001>
module attributes {stable_mosaic.version = 11 : i64} {
  func.func @_cost_kernel(%arg0: i32, %arg1: i32, %arg2: memref<1x8x256xf32, #tpu.memory_space<vmem>>, %arg3: memref<1x128x256xbf16, #tpu.memory_space<vmem>>, %arg4: memref<1x8x32xf32, #tpu.memory_space<vmem>>, %arg5: memref<1x32x128xf32, #tpu.memory_space<vmem>>, %arg6: memref<1x8x128xf32, #tpu.memory_space<vmem>>, %arg7: memref<17x128xf32, #tpu.memory_space<vmem>>, %arg8: memref<8x1xf32, #tpu.memory_space<vmem>>, %arg9: memref<8x1xf32, #tpu.memory_space<vmem>>) attributes {dimension_semantics = [#tpu.dimension_semantics<parallel>, #tpu.dimension_semantics<arbitrary>], iteration_bounds = array<i64: 2, 1>, scalar_prefetch = 0 : i64, scratch_operands = 3 : i64, tpu.core_type = #tpu.core_type<tc>, window_params = [{transform_indices = @transform_0, window_bounds = array<i64: 1, 8, 256>}, {transform_indices = @transform_1, window_bounds = array<i64: 1, 128, 256>}, {transform_indices = @transform_2, window_bounds = array<i64: 1, 8, 32>}, {transform_indices = @transform_3, window_bounds = array<i64: 1, 32, 128>}, {transform_indices = @transform_4, window_bounds = array<i64: 1, 8, 128>}]} {
    %c0_i32 = arith.constant 0 : i32
    %0 = arith.cmpi eq, %arg1, %c0_i32 : i32
    %1 = arith.extui %0 : i1 to i32
    %c0_i32_0 = arith.constant 0 : i32
    %2 = arith.cmpi ne, %1, %c0_i32_0 : i32
    scf.if %2 {
      %cst_31 = arith.constant 0.000000e+00 : f32
      %56 = vector.broadcast %cst_31 : f32 to vector<17x128xf32>
      %c0_32 = arith.constant 0 : index
      %c0_33 = arith.constant 0 : index
      %57 = vector.load %arg7[%c0_32, %c0_33] : memref<17x128xf32, #tpu.memory_space<vmem>>, vector<17x128xf32>
      tpu.vector_store %arg7[%c0_32, %c0_33], %56 {strides = array<i32>} : memref<17x128xf32, #tpu.memory_space<vmem>>, vector<17x128xf32>,
      %cst_34 = arith.constant 0.000000e+00 : f32
      %58 = vector.broadcast %cst_34 : f32 to vector<8x1xf32>
      %c0_35 = arith.constant 0 : index
      %c0_36 = arith.constant 0 : index
      %59 = vector.load %arg8[%c0_35, %c0_36] : memref<8x1xf32, #tpu.memory_space<vmem>>, vector<8x1xf32>
      tpu.vector_store %arg8[%c0_35, %c0_36], %58 {strides = array<i32>} : memref<8x1xf32, #tpu.memory_space<vmem>>, vector<8x1xf32>,
      %cst_37 = arith.constant 0.000000e+00 : f32
      %60 = vector.broadcast %cst_37 : f32 to vector<8x1xf32>
      %c0_38 = arith.constant 0 : index
      %c0_39 = arith.constant 0 : index
      %61 = vector.load %arg9[%c0_38, %c0_39] : memref<8x1xf32, #tpu.memory_space<vmem>>, vector<8x1xf32>
      tpu.vector_store %arg9[%c0_38, %c0_39], %60 {strides = array<i32>} : memref<8x1xf32, #tpu.memory_space<vmem>>, vector<8x1xf32>,
    } else {
    }
    %c0 = arith.constant 0 : index
    %c0_1 = arith.constant 0 : index
    %c0_2 = arith.constant 0 : index
    %3 = vector.load %arg2[%c0, %c0_1, %c0_2] : memref<1x8x256xf32, #tpu.memory_space<vmem>>, vector<1x8x256xf32>
    %4 = vector.shape_cast %3 : vector<1x8x256xf32> to vector<8x256xf32>
    %c0_3 = arith.constant 0 : index
    %c0_4 = arith.constant 0 : index
    %c0_5 = arith.constant 0 : index
    %5 = vector.load %arg3[%c0_3, %c0_4, %c0_5] : memref<1x128x256xbf16, #tpu.memory_space<vmem>>, vector<1x128x256xbf16>
    %6 = vector.shape_cast %5 : vector<1x128x256xbf16> to vector<128x256xbf16>
    %7 = math.absf %4 : vector<8x256xf32>
    %cst = arith.constant 0.000000e+00 : f32
    %8 = vector.broadcast %cst : f32 to vector<8x256xf32>
    %9 = arith.subf %8, %7 : vector<8x256xf32>
    %10 = math.exp %9 : vector<8x256xf32>
    %11 = math.log1p %10 : vector<8x256xf32>
    %cst_6 = arith.constant 1.000000e+00 : f32
    %12 = vector.broadcast %cst_6 : f32 to vector<8x256xf32>
    %13 = arith.addf %12, %10 : vector<8x256xf32>
    %cst_7 = arith.constant 1.000000e+00 : f32
    %14 = vector.broadcast %cst_7 : f32 to vector<8x256xf32>
    %15 = arith.divf %14, %13 : vector<8x256xf32>
    %cst_8 = arith.constant 0.000000e+00 : f32
    %16 = vector.broadcast %cst_8 : f32 to vector<8x256xf32>
    %17 = arith.cmpf oge, %4, %16 : vector<8x256xf32>
    %18 = arith.mulf %10, %15 : vector<8x256xf32>
    %19 = arith.select %17, %15, %18 : vector<8x256xi1>, vector<8x256xf32>
    %cst_9 = arith.constant 1.000000e+00 : f32
    %20 = vector.broadcast %cst_9 : f32 to vector<8x256xf32>
    %21 = arith.subf %20, %19 : vector<8x256xf32>
    %cst_10 = arith.constant 0.000000e+00 : f32
    %22 = vector.broadcast %cst_10 : f32 to vector<8x256xf32>
    %23 = arith.maximumf %4, %22 : vector<8x256xf32>
    %24 = arith.subf %23, %4 : vector<8x256xf32>
    %25 = arith.addf %24, %11 : vector<8x256xf32>
    %26 = arith.addf %23, %11 : vector<8x256xf32>
    %27 = arith.mulf %21, %21 : vector<8x256xf32>
    %28 = arith.mulf %27, %25 : vector<8x256xf32>
    %cst_11 = arith.constant 2.500000e-01 : f32
    %29 = vector.broadcast %cst_11 : f32 to vector<8x256xf32>
    %30 = arith.mulf %28, %29 : vector<8x256xf32>
    %31 = arith.mulf %19, %19 : vector<8x256xf32>
    %32 = arith.mulf %31, %26 : vector<8x256xf32>
    %cst_12 = arith.constant 7.500000e-01 : f32
    %33 = vector.broadcast %cst_12 : f32 to vector<8x256xf32>
    %34 = arith.mulf %32, %33 : vector<8x256xf32>
    %35 = arith.subf %30, %34 : vector<8x256xf32>
    %cst_13 = arith.constant 1.000000e+00 : f32
    %36 = vector.broadcast %cst_13 : f32 to vector<1x256xf32>
    %37 = tpu.concatenate %35, %19, %36 in 0 : vector<8x256xf32>, vector<8x256xf32>, vector<1x256xf32> -> vector<17x256xf32>
    %38 = arith.truncf %37 : vector<17x256xf32> to vector<17x256xbf16>
    %c0_14 = arith.constant 0 : index
    %c0_15 = arith.constant 0 : index
    %39 = vector.load %arg7[%c0_14, %c0_15] : memref<17x128xf32, #tpu.memory_space<vmem>>, vector<17x128xf32>
    %cst_16 = arith.constant dense<0.000000e+00> : vector<17x128xf32>
    %40 = tpu.matmul %38, %6, %cst_16 {dimension_numbers = #tpu.dot_dimension_numbers<[1], [1], [0], [0], [0, 0, 1, 0], [], []>} : vector<17x256xbf16>, vector<128x256xbf16>, vector<17x128xf32> -> vector<17x128xf32>
    %41 = arith.addf %39, %40 : vector<17x128xf32>
    %c0_17 = arith.constant 0 : index
    %c0_18 = arith.constant 0 : index
    %42 = vector.load %arg7[%c0_17, %c0_18] : memref<17x128xf32, #tpu.memory_space<vmem>>, vector<17x128xf32>
    tpu.vector_store %arg7[%c0_17, %c0_18], %41 {strides = array<i32>} : memref<17x128xf32, #tpu.memory_space<vmem>>, vector<17x128xf32>,
    %c0_19 = arith.constant 0 : index
    %c0_20 = arith.constant 0 : index
    %43 = vector.load %arg8[%c0_19, %c0_20] : memref<8x1xf32, #tpu.memory_space<vmem>>, vector<8x1xf32>
    %cst_21 = arith.constant dense<0.000000e+00> : vector<8xf32>
    %44 = vector.multi_reduction <add>, %34, %cst_21 [1] : vector<8x256xf32> to vector<8xf32>
    %45 = vector.shape_cast %44 : vector<8xf32> to vector<8x1xf32>
    %46 = arith.addf %43, %45 : vector<8x1xf32>
    %c0_22 = arith.constant 0 : index
    %c0_23 = arith.constant 0 : index
    %47 = vector.load %arg8[%c0_22, %c0_23] : memref<8x1xf32, #tpu.memory_space<vmem>>, vector<8x1xf32>
    tpu.vector_store %arg8[%c0_22, %c0_23], %46 {strides = array<i32>} : memref<8x1xf32, #tpu.memory_space<vmem>>, vector<8x1xf32>,
    %c0_24 = arith.constant 0 : index
    %c0_25 = arith.constant 0 : index
    %48 = vector.load %arg9[%c0_24, %c0_25] : memref<8x1xf32, #tpu.memory_space<vmem>>, vector<8x1xf32>
    %cst_26 = arith.constant dense<0.000000e+00> : vector<8xf32>
    %49 = vector.multi_reduction <add>, %19, %cst_26 [1] : vector<8x256xf32> to vector<8xf32>
    %50 = vector.shape_cast %49 : vector<8xf32> to vector<8x1xf32>
    %51 = arith.addf %48, %50 : vector<8x1xf32>
    %c0_27 = arith.constant 0 : index
    %c0_28 = arith.constant 0 : index
    %52 = vector.load %arg9[%c0_27, %c0_28] : memref<8x1xf32, #tpu.memory_space<vmem>>, vector<8x1xf32>
    tpu.vector_store %arg9[%c0_27, %c0_28], %51 {strides = array<i32>} : memref<8x1xf32, #tpu.memory_space<vmem>>, vector<8x1xf32>,
    %c0_i32_29 = arith.constant 0 : i32
    %53 = arith.cmpi eq, %arg1, %c0_i32_29 : i32
    %54 = arith.extui %53 : i1 to i32
    %c0_i32_30 = arith.constant 0 : i32
    %55 = arith.cmpi ne, %54, %c0_i32_30 : i32
    scf.if %55 {
      %c0_31 = arith.constant 0 : index
      %c0_32 = arith.constant 0 : index
      %56 = vector.load %arg7[%c0_31, %c0_32] : memref<17x128xf32, #tpu.memory_space<vmem>>, vector<8x128xf32>
      %c8 = arith.constant 8 : index
      %c0_33 = arith.constant 0 : index
      %57 = vector.load %arg7[%c8, %c0_33] : memref<17x128xf32, #tpu.memory_space<vmem>>, vector<8x128xf32>
      %c16 = arith.constant 16 : index
      %c0_34 = arith.constant 0 : index
      %58 = vector.load %arg7[%c16, %c0_34] : memref<17x128xf32, #tpu.memory_space<vmem>>, vector<1x128xf32>
      %c0_35 = arith.constant 0 : index
      %c0_36 = arith.constant 0 : index
      %59 = vector.load %arg8[%c0_35, %c0_36] : memref<8x1xf32, #tpu.memory_space<vmem>>, vector<8x1xf32>
      %60 = vector.broadcast %59 : vector<8x1xf32> to vector<8x128xf32>
      %61 = arith.addf %56, %60 : vector<8x128xf32>
      %cst_37 = arith.constant 2.560000e+02 : f32
      %62 = vector.broadcast %cst_37 : f32 to vector<8x128xf32>
      %63 = arith.divf %61, %62 : vector<8x128xf32>
      %cst_38 = arith.constant 2.000000e+00 : f32
      %64 = vector.broadcast %cst_38 : f32 to vector<8x128xf32>
      %65 = arith.mulf %64, %57 : vector<8x128xf32>
      %c0_39 = arith.constant 0 : index
      %c0_40 = arith.constant 0 : index
      %66 = vector.load %arg9[%c0_39, %c0_40] : memref<8x1xf32, #tpu.memory_space<vmem>>, vector<8x1xf32>
      %67 = vector.broadcast %66 : vector<8x1xf32> to vector<8x128xf32>
      %68 = vector.broadcast %58 : vector<1x128xf32> to vector<8x128xf32>
      %69 = arith.addf %67, %68 : vector<8x128xf32>
      %cst_41 = arith.constant 1.000000e+00 : f32
      %70 = vector.broadcast %cst_41 : f32 to vector<8x128xf32>
      %71 = arith.addf %65, %70 : vector<8x128xf32>
      %cst_42 = arith.constant 1.000000e+00 : f32
      %72 = vector.broadcast %cst_42 : f32 to vector<8x128xf32>
      %73 = arith.addf %69, %72 : vector<8x128xf32>
      %74 = arith.divf %71, %73 : vector<8x128xf32>
      %cst_43 = arith.constant 1.000000e+00 : f32
      %75 = vector.broadcast %cst_43 : f32 to vector<8x128xf32>
      %76 = arith.subf %75, %74 : vector<8x128xf32>
      %c0_44 = arith.constant 0 : index
      %c0_45 = arith.constant 0 : index
      %c0_46 = arith.constant 0 : index
      %77 = vector.load %arg4[%c0_44, %c0_45, %c0_46] : memref<1x8x32xf32, #tpu.memory_space<vmem>>, vector<1x8x32xf32>
      %78 = vector.shape_cast %77 : vector<1x8x32xf32> to vector<8x32xf32>
      %c0_47 = arith.constant 0 : index
      %c0_48 = arith.constant 0 : index
      %c0_49 = arith.constant 0 : index
      %79 = vector.load %arg5[%c0_47, %c0_48, %c0_49] : memref<1x32x128xf32, #tpu.memory_space<vmem>>, vector<1x32x128xf32>
      %80 = vector.shape_cast %79 : vector<1x32x128xf32> to vector<32x128xf32>
      %81 = arith.mulf %78, %78 : vector<8x32xf32>
      %cst_50 = arith.constant dense<0.000000e+00> : vector<8xf32>
      %82 = vector.multi_reduction <add>, %81, %cst_50 [1] : vector<8x32xf32> to vector<8xf32>
      %83 = vector.shape_cast %82 : vector<8xf32> to vector<8x1xf32>
      %84 = math.sqrt %83 : vector<8x1xf32>
      %cst_51 = arith.constant 9.99999993E-9 : f32
      %85 = vector.broadcast %cst_51 : f32 to vector<8x1xf32>
      %86 = arith.maximumf %84, %85 : vector<8x1xf32>
      %cst_52 = arith.constant 1.000000e+00 : f32
      %87 = vector.broadcast %cst_52 : f32 to vector<8x1xf32>
      %88 = arith.divf %87, %86 : vector<8x1xf32>
      %89 = arith.mulf %80, %80 : vector<32x128xf32>
      %cst_53 = arith.constant dense<0.000000e+00> : vector<128xf32>
      %90 = vector.multi_reduction <add>, %89, %cst_53 [0] : vector<32x128xf32> to vector<128xf32>
      %91 = vector.shape_cast %90 : vector<128xf32> to vector<1x128xf32>
      %92 = math.sqrt %91 : vector<1x128xf32>
      %cst_54 = arith.constant 9.99999993E-9 : f32
      %93 = vector.broadcast %cst_54 : f32 to vector<1x128xf32>
      %94 = arith.maximumf %92, %93 : vector<1x128xf32>
      %cst_55 = arith.constant 1.000000e+00 : f32
      %95 = vector.broadcast %cst_55 : f32 to vector<1x128xf32>
      %96 = arith.divf %95, %94 : vector<1x128xf32>
      %97 = vector.broadcast %88 : vector<8x1xf32> to vector<8x32xf32>
      %98 = arith.mulf %78, %97 : vector<8x32xf32>
      %99 = vector.broadcast %96 : vector<1x128xf32> to vector<32x128xf32>
      %100 = arith.mulf %80, %99 : vector<32x128xf32>
      %cst_56 = arith.constant dense<0.000000e+00> : vector<8x128xf32>
      %101 = tpu.matmul %98, %100, %cst_56 {dimension_numbers = #tpu.dot_dimension_numbers<[1], [0], [0], [1], [0, 0, 1, 1], [], []>} : vector<8x32xf32>, vector<32x128xf32>, vector<8x128xf32> -> vector<8x128xf32>
      %102 = vector.shape_cast %78 : vector<8x32xf32> to vector<8x32x1xf32>
      %103 = vector.shape_cast %80 : vector<32x128xf32> to vector<1x32x128xf32>
      %104 = vector.broadcast %102 : vector<8x32x1xf32> to vector<8x32x128xf32>
      %105 = vector.broadcast %103 : vector<1x32x128xf32> to vector<8x32x128xf32>
      %106 = arith.subf %104, %105 : vector<8x32x128xf32>
      %107 = math.absf %106 : vector<8x32x128xf32>
      %cst_57 = arith.constant dense<0.000000e+00> : vector<8x128xf32>
      %108 = vector.multi_reduction <add>, %107, %cst_57 [1] : vector<8x32x128xf32> to vector<8x128xf32>
      %cst_58 = arith.constant 3.125000e-02 : f32
      %109 = vector.broadcast %cst_58 : f32 to vector<8x128xf32>
      %110 = arith.mulf %108, %109 : vector<8x128xf32>
      %cst_59 = arith.constant 1.000000e+00 : f32
      %111 = vector.broadcast %cst_59 : f32 to vector<8x128xf32>
      %112 = arith.subf %111, %101 : vector<8x128xf32>
      %113 = arith.addf %112, %110 : vector<8x128xf32>
      %cst_60 = arith.constant 1.000000e+00 : f32
      %114 = vector.broadcast %cst_60 : f32 to vector<8x128xf32>
      %115 = arith.mulf %114, %63 : vector<8x128xf32>
      %cst_61 = arith.constant 1.000000e+00 : f32
      %116 = vector.broadcast %cst_61 : f32 to vector<8x128xf32>
      %117 = arith.mulf %116, %113 : vector<8x128xf32>
      %118 = arith.addf %115, %117 : vector<8x128xf32>
      %cst_62 = arith.constant 5.000000e-02 : f32
      %119 = vector.broadcast %cst_62 : f32 to vector<8x128xf32>
      %120 = arith.mulf %119, %76 : vector<8x128xf32>
      %121 = arith.addf %118, %120 : vector<8x128xf32>
      %c0_63 = arith.constant 0 : index
      %c0_64 = arith.constant 0 : index
      %c0_65 = arith.constant 0 : index
      %122 = vector.load %arg6[%c0_63, %c0_64, %c0_65] : memref<1x8x128xf32, #tpu.memory_space<vmem>>, vector<1x8x128xf32>
      %123 = vector.shape_cast %122 : vector<1x8x128xf32> to vector<8x128xf32>
      %124 = vector.shape_cast %121 : vector<8x128xf32> to vector<1x8x128xf32>
      tpu.vector_store %arg6[%c0_63, %c0_64, %c0_65], %124 {strides = array<i32>} : memref<1x8x128xf32, #tpu.memory_space<vmem>>, vector<1x8x128xf32>,
    } else {
    }
    return
  }
  func.func @transform_0(%arg0: i32, %arg1: i32) -> (i32, i32, i32) {
    %c0_i32 = arith.constant 0 : i32
    %c0_i32_0 = arith.constant 0 : i32
    return %arg0, %c0_i32, %arg1 : i32, i32, i32
  }
  func.func @transform_1(%arg0: i32, %arg1: i32) -> (i32, i32, i32) {
    %c0_i32 = arith.constant 0 : i32
    %c0_i32_0 = arith.constant 0 : i32
    return %arg0, %c0_i32, %arg1 : i32, i32, i32
  }
  func.func @transform_2(%arg0: i32, %arg1: i32) -> (i32, i32, i32) {
    %c0_i32 = arith.constant 0 : i32
    %c0_i32_0 = arith.constant 0 : i32
    %c0_i32_1 = arith.constant 0 : i32
    return %arg0, %c0_i32, %c0_i32_0 : i32, i32, i32
  }
  func.func @transform_3(%arg0: i32, %arg1: i32) -> (i32, i32, i32) {
    %c0_i32 = arith.constant 0 : i32
    %c0_i32_0 = arith.constant 0 : i32
    %c0_i32_1 = arith.constant 0 : i32
    return %arg0, %c0_i32, %c0_i32_0 : i32, i32, i32
  }
  func.func @transform_4(%arg0: i32, %arg1: i32) -> (i32, i32, i32) {
    %c0_i32 = arith.constant 0 : i32
    %c0_i32_0 = arith.constant 0 : i32
    %c0_i32_1 = arith.constant 0 : i32
    return %arg0, %c0_i32, %c0_i32_0 : i32, i32, i32
  }
}

</mosaic_0001>

<llo_original>
// kernel: tpu_custom_call.1
$region0: #{tpu_custom_call.1}
  #allocation0 [shape = 'u32[]', space=smem, size = 0x4, offset = 0x4, fixed_abs, tag = 'smem constant byte address 0x4 - core index']
  #allocation1 [shape = 'u32[144,128]{1,0:T(1,128)}', space=vmem, size = 0x12000, scoped, tag = 'internal scratch']
  #allocation2 [shape = 'f32[17,128]{1,0:T(8,128)}', space=vmem, size = 0x3000, scoped, tag = 'scratch operand']
  #allocation3 [shape = 'f32[8,1]{1,0:T(8,128)}', space=vmem, size = 0x1000, scoped, tag = 'scratch operand']
  #allocation4 [shape = 'f32[8,1]{1,0:T(8,128)}', space=vmem, size = 0x1000, scoped, tag = 'scratch operand']
  %s0 = inlined_call_operand.hbm [shape: f32[2,8,256], index: 0, kind: input, shape index: {}]
  %s1 = inlined_call_operand.hbm [shape: bf16[2,128,256], index: 1, kind: input, shape index: {}]
  %s2 = inlined_call_operand.hbm [shape: f32[2,8,32], index: 2, kind: input, shape index: {}]
  %s3 = inlined_call_operand.hbm [shape: f32[2,32,128], index: 3, kind: input, shape index: {}]
  %s4 = inlined_call_operand.hbm [shape: f32[2,8,128], index: 4, kind: output, shape index: {}]
  %s5 = sld [smem:[#allocation0]]
  $region73: #{tpu_custom_call.1} parent=0
    _
  %s7 = ssub.s32 1, %s5
  %s8 = scalar_select 0, %s7, %s5
  $region1: #{tpu_custom_call.1} parent=0
    #allocation5 [shape = 'u8[16384]{0}', space=vmem, size = 0x4000, scoped, tag = 'input window, operand 0']
    #allocation6 [shape = 's32[2]{0}', space=sflag, size = 0x8, scoped, tag = 'scoped memory for tpu_custom_call.1']
    #allocation7 [shape = 's32[2]{0}', space=sflag, size = 0x8, scoped, tag = 'scoped memory for tpu_custom_call.1']
    #allocation8 [shape = 'u8[131072]{0}', space=vmem, size = 0x20000, scoped, tag = 'input window, operand 1']
    #allocation9 [shape = 's32[2]{0}', space=sflag, size = 0x8, scoped, tag = 'scoped memory for tpu_custom_call.1']
    #allocation10 [shape = 'u8[8192]{0}', space=vmem, size = 0x2000, scoped, tag = 'input window, operand 2']
    #allocation11 [shape = 'u8[32768]{0}', space=vmem, size = 0x8000, scoped, tag = 'input window, operand 3']
    #allocation12 [shape = 's32[2]{0}', space=sflag, size = 0x8, scoped, tag = 'scoped memory for tpu_custom_call.1']
    #allocation13 [shape = 'u8[8192]{0}', space=vmem, size = 0x2000, scoped, tag = 'output window, operand 0']
    %9 = vsyncpa [#allocation6], 0
    %s10 = scalar_lea.sflag [#allocation6], 1
    %11 = vsyncpa %s10, 0
    %12 = vsyncpa [#allocation9], 0
    %s13 = scalar_lea.sflag [#allocation9], 1
    %14 = vsyncpa %s13, 0
    %15 = vsyncpa [#allocation12], 0
    %s16 = scalar_lea.sflag [#allocation12], 1
    %17 = vsyncpa %s16, 0
    %18 = vsyncpa [#allocation7], 0
    %s19 = scalar_lea.sflag [#allocation7], 1
    %20 = vsyncpa %s19, 0
    loop: start=0, step=1, limit=4
    $region2: #{tpu_custom_call.1} parent=1 // loop_pre_header
      _
    $region3: #{tpu_custom_call.1} parent=1 // loop_header
      %s22 = sphi 0, %s26
      %p23 = scmp.ge.s32.totalorder %s22, 4
      %s29 = sphi 0, %s41
      %s30 = sphi 0, %s37
      %s31 = sphi 0, %s29
      %s32 = sphi 0, %s30
      %s33 = sphi 0, %s31
      %s34 = sphi 0, %s32
      %s46 = sphi 0, %s48
      %s49 = sphi 0, %s46
      %s50 = sphi 0, %s49
      %s66 = sphi 0, %s50
      %s74 = sphi 0, %s76
      %s77 = sphi 0, %s74
      %s78 = sphi 0, %s77
      %s94 = sphi 0, %s78
      %s100 = sphi 0, %s102
      %s103 = sphi 0, %s100
      %s104 = sphi 0, %s103
      %s120 = sphi 0, %s104
      %s126 = sphi 0, %s128
      %s129 = sphi 0, %s126
      %s130 = sphi 0, %s129
      %s146 = sphi 0, %s130
      %s152 = sphi 0, %s154
      %s155 = sphi 0, %s152
      %s156 = sphi 0, %s155
      %s172 = sphi 0, %s156
    $region4: #{tpu_custom_call.1} parent=1 // loop_header_branch
      %25 = sbr.rel (%p23) target = $region8
    $region5: #{tpu_custom_call.1} parent=1 // loop_body
      %s27 = ssub.s32 %s22, 1
      %s28 = ssub.s32 %s22, 2
      %s35 = sadd.s32 1, %s30
      %p36 = scmp.ge.s32.totalorder %s35, 1
      %s37 = scalar_select %p36, 0, %s35
      %s38 = sadd.s32 1, %s29
      %s39 = scalar_select %p36, %s38, %s29
      %p40 = scmp.ge.s32.totalorder %s39, 2
      %s41 = scalar_select %p40, 0, %s39
      %s42 = ssub.s32 %s29, %s41
      %s43 = ssub.s32 %s30, %s37
      %s44 = sor.u32 %s42, %s43
      %p45 = scmp.eq.s32.totalorder %s44, 0
      %s47 = sadd.s32 %s46, 1
      %s48 = scalar_select %p45, %s46, %s47
      %p51 = pneg %p45
      %p52 = scmp.eq.s32.totalorder %s22, 1
      %p53 = por %p51, %p52
      %p54 = scmp.ne.s32.totalorder %s46, %s49
      %p55 = scmp.eq.s32.totalorder %s22, 0
      %p56 = por %p54, %p55
      %p57 = scmp.ne.s32.totalorder %s46, %s49
      %p58 = scmp.eq.s32.totalorder %s27, 1
      %p59 = por %p57, %p58
      %p60 = scmp.ne.s32.totalorder %s49, %s50
      %p61 = scmp.eq.s32.totalorder %s27, 0
      %p62 = por %p60, %p61
      %p63 = scmp.ne.s32.totalorder %s49, %s50
      %p64 = scmp.eq.s32.totalorder %s28, 1
      %p65 = por %p63, %p64
      %p67 = scmp.ne.s32.totalorder %s50, %s66
      %p68 = scmp.eq.s32.totalorder %s28, 0
      %p69 = por %p67, %p68
      %s70 = ssub.s32 %s29, %s41
      %s71 = ssub.s32 %s30, %s37
      %s72 = sor.u32 %s70, %s71
      %p73 = scmp.eq.s32.totalorder %s72, 0
      %s75 = sadd.s32 %s74, 1
      %s76 = scalar_select %p73, %s74, %s75
      %p79 = pneg %p73
      %p80 = scmp.eq.s32.totalorder %s22, 1
      %p81 = por %p79, %p80
      %p82 = scmp.ne.s32.totalorder %s74, %s77
      %p83 = scmp.eq.s32.totalorder %s22, 0
      %p84 = por %p82, %p83
      %p85 = scmp.ne.s32.totalorder %s74, %s77
      %p86 = scmp.eq.s32.totalorder %s27, 1
      %p87 = por %p85, %p86
      %p88 = scmp.ne.s32.totalorder %s77, %s78
      %p89 = scmp.eq.s32.totalorder %s27, 0
      %p90 = por %p88, %p89
      %p91 = scmp.ne.s32.totalorder %s77, %s78
      %p92 = scmp.eq.s32.totalorder %s28, 1
      %p93 = por %p91, %p92
      %p95 = scmp.ne.s32.totalorder %s78, %s94
      %p96 = scmp.eq.s32.totalorder %s28, 0
      %p97 = por %p95, %p96
      %s98 = ssub.s32 %s29, %s41
      %p99 = scmp.eq.s32.totalorder %s98, 0
      %s101 = sadd.s32 %s100, 1
      %s102 = scalar_select %p99, %s100, %s101
      %p105 = pneg %p99
      %p106 = scmp.eq.s32.totalorder %s22, 1
      %p107 = por %p105, %p106
      %p108 = scmp.ne.s32.totalorder %s100, %s103
      %p109 = scmp.eq.s32.totalorder %s22, 0
      %p110 = por %p108, %p109
      %p111 = scmp.ne.s32.totalorder %s100, %s103
      %p112 = scmp.eq.s32.totalorder %s27, 1
      %p113 = por %p111, %p112
      %p114 = scmp.ne.s32.totalorder %s103, %s104
      %p115 = scmp.eq.s32.totalorder %s27, 0
      %p116 = por %p114, %p115
      %p117 = scmp.ne.s32.totalorder %s103, %s104
      %p118 = scmp.eq.s32.totalorder %s28, 1
      %p119 = por %p117, %p118
      %p121 = scmp.ne.s32.totalorder %s104, %s120
      %p122 = scmp.eq.s32.totalorder %s28, 0
      %p123 = por %p121, %p122
      %s124 = ssub.s32 %s29, %s41
      %p125 = scmp.eq.s32.totalorder %s124, 0
      %s127 = sadd.s32 %s126, 1
      %s128 = scalar_select %p125, %s126, %s127
      %p131 = pneg %p125
      %p132 = scmp.eq.s32.totalorder %s22, 1
      %p133 = por %p131, %p132
      %p134 = scmp.ne.s32.totalorder %s126, %s129
      %p135 = scmp.eq.s32.totalorder %s22, 0
      %p136 = por %p134, %p135
      %p137 = scmp.ne.s32.totalorder %s126, %s129
      %p138 = scmp.eq.s32.totalorder %s27, 1
      %p139 = por %p137, %p138
      %p140 = scmp.ne.s32.totalorder %s129, %s130
      %p141 = scmp.eq.s32.totalorder %s27, 0
      %p142 = por %p140, %p141
      %p143 = scmp.ne.s32.totalorder %s129, %s130
      %p144 = scmp.eq.s32.totalorder %s28, 1
      %p145 = por %p143, %p144
      %p147 = scmp.ne.s32.totalorder %s130, %s146
      %p148 = scmp.eq.s32.totalorder %s28, 0
      %p149 = por %p147, %p148
      %s150 = ssub.s32 %s29, %s41
      %p151 = scmp.eq.s32.totalorder %s150, 0
      %s153 = sadd.s32 %s152, 1
      %s154 = scalar_select %p151, %s152, %s153
      %p157 = pneg %p151
      %p158 = scmp.eq.s32.totalorder %s22, 1
      %p159 = por %p157, %p158
      %p160 = scmp.ne.s32.totalorder %s152, %s155
      %p161 = scmp.eq.s32.totalorder %s22, 0
      %p162 = por %p160, %p161
      %p163 = scmp.ne.s32.totalorder %s152, %s155
      %p164 = scmp.eq.s32.totalorder %s27, 1
      %p165 = por %p163, %p164
      %p166 = scmp.ne.s32.totalorder %s155, %s156
      %p167 = scmp.eq.s32.totalorder %s27, 0
      %p168 = por %p166, %p167
      %p169 = scmp.ne.s32.totalorder %s155, %s156
      %p170 = scmp.eq.s32.totalorder %s28, 1
      %p171 = por %p169, %p170
      %p173 = scmp.ne.s32.totalorder %s156, %s172
      %p174 = scmp.eq.s32.totalorder %s28, 0
      %p175 = por %p173, %p174
      %p176 = scmp.le.s32.totalorder 1, %s22
      %p177 = scmp.lt.s32.totalorder %s22, 3
      %p178 = pnand %p176, %p177
      %p179 = pneg %p178
      // Predicated region
      $region9: #{tpu_custom_call.1} parent=5 // pred_check
        _
      $region10: #{tpu_custom_call.1} parent=5 // pred_check_branch
        %181 = sbr.rel (%p178) target = $region12
      $region11: #{tpu_custom_call.1} parent=5 // pred_region
        %s182 = ssub.s32 %s22, 1
      $region12: #{tpu_custom_call.1} parent=5 // pred_fallthru
        _
      %p183 = scmp.lt.s32.totalorder %s22, 2
      // Predicated region
      $region13: #{tpu_custom_call.1} parent=5 // pred_check
        %p184 = pneg %p183
      $region14: #{tpu_custom_call.1} parent=5 // pred_check_branch
        %186 = sbr.rel (%p184) target = $region16
      $region15: #{tpu_custom_call.1} parent=5 // pred_region
        // Predicated region
        $region17: #{tpu_custom_call.1} parent=15 // pred_check
          %p187 = pneg %p56
        $region18: #{tpu_custom_call.1} parent=15 // pred_check_branch
          %189 = sbr.rel (%p187) target = $region20
        $region19: #{tpu_custom_call.1} parent=15 // pred_region
          %s190 = sand.u32 %s46, 1
          %s191 = scalar_lea.sflag [#allocation6], %s190
          %s192 = sand.u32 %s46, 1
          %s193 = smul.addr %s192, 16
          %s194 = scalar_lea.vmem [#allocation5], %s193
          %s195 = smul.u32 2, %s30
          %s197 = ssub.s32 256, 256
          %198 = vsyncadd %s191, %s197
          %s199 = smul.addr %s29, 2
          %s200 = sadd.s32 %s195, %s199
          %s201 = smul.addr %s200, 128
          %s202 = scalar_lea.hbm %s0, %s201
          %s204 = sshll.u32 %s194, 4
          %s205 = int_to_ptr.vmem [resolvable:$true] %s204
          %207 = dma.hbm_to_vmem [thread:$0]  %s202, 256, %s205, %s191
        $region20: #{tpu_custom_call.1} parent=15 // pred_fallthru
          _
        // Predicated region
        $region21: #{tpu_custom_call.1} parent=15 // pred_check
          %p208 = pneg %p84
        $region22: #{tpu_custom_call.1} parent=15 // pred_check_branch
          %210 = sbr.rel (%p208) target = $region24
        $region23: #{tpu_custom_call.1} parent=15 // pred_region
          %s211 = sand.u32 %s22, 1
          %s212 = scalar_lea.sflag [#allocation9], %s211
          %s213 = sand.u32 %s74, 1
          %s214 = smul.addr %s213, 128
          %s215 = scalar_lea.vmem [#allocation8], %s214
          %s216 = smul.u32 2, %s30
          %s218 = ssub.s32 2048, 2048
          %219 = vsyncadd %s212, %s218
          %s220 = smul.addr %s29, 32
          %s221 = sadd.s32 %s216, %s220
          %s222 = smul.addr %s221, 64
          %s223 = scalar_lea.hbm %s1, %s222
          %s224 = sshll.u32 %s215, 4
          %s225 = int_to_ptr.vmem [resolvable:$true] %s224
          %230 = dma.hbm_to_vmem [thread:$0]  %s223, 2048, %s225, %s212, 128, 128, 8
        $region24: #{tpu_custom_call.1} parent=15 // pred_fallthru
          _
        // Predicated region
        $region25: #{tpu_custom_call.1} parent=15 // pred_check
          %p231 = pneg %p110
        $region26: #{tpu_custom_call.1} parent=15 // pred_check_branch
          %233 = sbr.rel (%p231) target = $region28
        $region27: #{tpu_custom_call.1} parent=15 // pred_region
          %s234 = sand.u32 %s22, 1
          %s235 = scalar_lea.sflag [#allocation9], %s234
          %s236 = sand.u32 %s100, 1
          %s237 = smul.addr %s236, 8
          %s238 = scalar_lea.vmem [#allocation10], %s237
          %s240 = ssub.s32 128, 128
          %241 = vsyncadd %s235, %s240
          %s242 = smul.addr %s29, 128
          %s243 = scalar_lea.hbm %s2, %s242
          %s245 = sshll.u32 %s238, 4
          %s246 = int_to_ptr.vmem [resolvable:$true] %s245
          %248 = dma.hbm_to_vmem [thread:$0]  %s243, 128, %s246, %s235
        $region28: #{tpu_custom_call.1} parent=15 // pred_fallthru
          _
        // Predicated region
        $region29: #{tpu_custom_call.1} parent=15 // pred_check
          %p249 = pneg %p136
        $region30: #{tpu_custom_call.1} parent=15 // pred_check_branch
          %251 = sbr.rel (%p249) target = $region32
        $region31: #{tpu_custom_call.1} parent=15 // pred_region
          %s252 = sand.u32 %s126, 1
          %s253 = scalar_lea.sflag [#allocation12], %s252
          %s254 = sand.u32 %s126, 1
          %s255 = smul.addr %s254, 32
          %s256 = scalar_lea.vmem [#allocation11], %s255
          %s258 = ssub.s32 512, 512
          %259 = vsyncadd %s253, %s258
          %s260 = smul.addr %s29, 4
          %s261 = smul.addr %s260, 128
          %s262 = scalar_lea.hbm %s3, %s261
          %s263 = sshll.u32 %s256, 4
          %s264 = int_to_ptr.vmem [resolvable:$true] %s263
          %269 = dma.hbm_to_vmem [thread:$0]  %s262, 512, %s264, %s253, 128, 128, 8
        $region32: #{tpu_custom_call.1} parent=15 // pred_fallthru
          _
      $region16: #{tpu_custom_call.1} parent=5 // pred_fallthru
        _
      %p270 = scmp.le.s32.totalorder 1, %s22
      %p271 = scmp.lt.s32.totalorder %s22, 3
      %p272 = pnand %p270, %p271
      %p273 = pneg %p272
      // Predicated region
      $region33: #{tpu_custom_call.1} parent=5 // pred_check
        _
      $region34: #{tpu_custom_call.1} parent=5 // pred_check_branch
        %275 = sbr.rel (%p272) target = $region36
      $region35: #{tpu_custom_call.1} parent=5 // pred_region
        %s276 = ssub.s32 %s22, 1
        %s277 = sand.u32 %s49, 1
        %s278 = scalar_lea.sflag [#allocation6], %s277
        %s279 = sand.u32 %s49, 1
        %s280 = smul.addr %s279, 16
        %s281 = scalar_lea.vmem [#allocation5], %s280
        // Predicated region
        $region37: #{tpu_custom_call.1} parent=35 // pred_check
          %p282 = pneg %p62
        $region38: #{tpu_custom_call.1} parent=35 // pred_check_branch
          %284 = sbr.rel (%p282) target = $region40
        $region39: #{tpu_custom_call.1} parent=35 // pred_region
          %285 = dma.done %s278, 256
        $region40: #{tpu_custom_call.1} parent=35 // pred_fallthru
          _
        %s286 = sand.u32 %s27, 1
        %s287 = scalar_lea.sflag [#allocation9], %s286
        %s288 = sand.u32 %s77, 1
        %s289 = smul.addr %s288, 128
        %s290 = scalar_lea.vmem [#allocation8], %s289
        // Predicated region
        $region41: #{tpu_custom_call.1} parent=35 // pred_check
          %p291 = pneg %p90
        $region42: #{tpu_custom_call.1} parent=35 // pred_check_branch
          %293 = sbr.rel (%p291) target = $region44
        $region43: #{tpu_custom_call.1} parent=35 // pred_region
          %294 = dma.done %s287, 2048
        $region44: #{tpu_custom_call.1} parent=35 // pred_fallthru
          _
        %s295 = sand.u32 %s27, 1
        %s296 = scalar_lea.sflag [#allocation9], %s295
        %s297 = sand.u32 %s103, 1
        %s298 = smul.addr %s297, 8
        %s299 = scalar_lea.vmem [#allocation10], %s298
        // Predicated region
        $region45: #{tpu_custom_call.1} parent=35 // pred_check
          %p300 = pneg %p116
        $region46: #{tpu_custom_call.1} parent=35 // pred_check_branch
          %302 = sbr.rel (%p300) target = $region48
        $region47: #{tpu_custom_call.1} parent=35 // pred_region
          %303 = dma.done %s296, 128
        $region48: #{tpu_custom_call.1} parent=35 // pred_fallthru
          _
        %s304 = sand.u32 %s129, 1
        %s305 = scalar_lea.sflag [#allocation12], %s304
        %s306 = sand.u32 %s129, 1
        %s307 = smul.addr %s306, 32
        %s308 = scalar_lea.vmem [#allocation11], %s307
        // Predicated region
        $region49: #{tpu_custom_call.1} parent=35 // pred_check
          %p309 = pneg %p142
        $region50: #{tpu_custom_call.1} parent=35 // pred_check_branch
          %311 = sbr.rel (%p309) target = $region52
        $region51: #{tpu_custom_call.1} parent=35 // pred_region
          %312 = dma.done %s305, 512
        $region52: #{tpu_custom_call.1} parent=35 // pred_fallthru
          _
        %s313 = sand.u32 %s49, 1
        %s314 = scalar_lea.sflag [#allocation6], %s313
        %s315 = sand.u32 %s49, 1
        %s316 = smul.addr %s315, 16
        %s317 = scalar_lea.vmem [#allocation5], %s316
        %p318 = pneg %p62
        %p319 = pneg %p59
        %s320 = sand.u32 %s27, 1
        %s321 = scalar_lea.sflag [#allocation9], %s320
        %s322 = sand.u32 %s77, 1
        %s323 = smul.addr %s322, 128
        %s324 = scalar_lea.vmem [#allocation8], %s323
        %p325 = pneg %p90
        %p326 = pneg %p87
        %s327 = sand.u32 %s27, 1
        %s328 = scalar_lea.sflag [#allocation9], %s327
        %s329 = sand.u32 %s103, 1
        %s330 = smul.addr %s329, 8
        %s331 = scalar_lea.vmem [#allocation10], %s330
        %p332 = pneg %p116
        %p333 = pneg %p113
        %s334 = sand.u32 %s129, 1
        %s335 = scalar_lea.sflag [#allocation12], %s334
        %s336 = sand.u32 %s129, 1
        %s337 = smul.addr %s336, 32
        %s338 = scalar_lea.vmem [#allocation11], %s337
        %p339 = pneg %p142
        %p340 = pneg %p139
        %p341 = pneg %p168
        %p342 = pneg %p165
        %s343 = sand.u32 %s155, 1
        %s344 = scalar_lea.sflag [#allocation7], %s343
        %s345 = sand.u32 %s155, 1
        %s346 = smul.addr %s345, 8
        %s347 = scalar_lea.vmem [#allocation13], %s346
        %s348 = smul.u32 2, %s32
        %s349 = smul.u32 2, %s32
        %p351 = scmp.eq.s32.totalorder %s32, 0
        // Predicated region
        $region53: #{tpu_custom_call.1} parent=35 // pred_check
          %p352 = pneg %p351
        $region54: #{tpu_custom_call.1} parent=35 // pred_check_branch
          %354 = sbr.rel (%p352) target = $region56
        $region55: #{tpu_custom_call.1} parent=35 // pred_region
          %355 = vst [vmem:[#allocation2] sm:$0xff] 0.0
          %356 = vst [vmem:[#allocation2 + $0x8] sm:$0xff] 0.0
          %357 = vst [vmem:[#allocation2 + $0x10] sm:$0x1] 0.0
          %vm358 = vcmask 7168
          %359 = vst.msk [vmem:[#allocation3] sm:$0xff] %vm358, 0.0
          %360 = vst.msk [vmem:[#allocation4] sm:$0xff] %vm358, 0.0
        $region56: #{tpu_custom_call.1} parent=35 // pred_fallthru
          _
        %v361 = vld [vmem:[%s281] sm:$0xff]
        %v362 = vld [vmem:[%s281 + $0x8] sm:$0xff]
        %v363 = vld [vmem:[%s290] sm:$0xff]
        %v364 = vld [vmem:[%s290 + $0x8] sm:$0xff]
        %v365 = vld [vmem:[%s290 + $0x10] sm:$0xff]
        %v366 = vld [vmem:[%s290 + $0x18] sm:$0xff]
        %v367 = vld [vmem:[%s290 + $0x20] sm:$0xff]
        %v368 = vld [vmem:[%s290 + $0x28] sm:$0xff]
        %v369 = vld [vmem:[%s290 + $0x30] sm:$0xff]
        %v370 = vld [vmem:[%s290 + $0x38] sm:$0xff]
        %v371 = vld [vmem:[%s290 + $0x40] sm:$0xff]
        %v372 = vld [vmem:[%s290 + $0x48] sm:$0xff]
        %v373 = vld [vmem:[%s290 + $0x50] sm:$0xff]
        %v374 = vld [vmem:[%s290 + $0x58] sm:$0xff]
        %v375 = vld [vmem:[%s290 + $0x60] sm:$0xff]
        %v376 = vld [vmem:[%s290 + $0x68] sm:$0xff]
        %v377 = vld [vmem:[%s290 + $0x70] sm:$0xff]
        %v378 = vld [vmem:[%s290 + $0x78] sm:$0xff]
        %v379 = vand.u32 2147483647, %v361
        %v380 = vand.u32 2147483647, %v362
        %v381 = vsub.f32 0.0, %v379
        %v382 = vsub.f32 0.0, %v380
        %v383 = vmul.f32 %v381, 1.442695
        %v384 = vpow.pop %v383
        %v385 = vmul.f32 %v382, 1.442695
        %v386 = vpow.pop %v385
        %v387 = vadd.f32 %v384, 1.0
        %v388 = vlog2.pop %v387
        %v389 = vmul.f32 %v388, 0.6931472
        %v390 = vmul.f32 -0.5, %v384
        %v391 = vadd.f32 %v390, 1.0
        %v392 = vmul.f32 %v391, %v384
        %v393 = vand.u32 2147483647, %v384
        %vm394 = vcmp.lt.f32.partialorder %v393, 0.0004427343
        %v395 = vsel %vm394, %v392, %v389
        %v396 = vadd.f32 %v386, 1.0
        %v397 = vlog2.pop %v396
        %v398 = vmul.f32 %v397, 0.6931472
        %v399 = vmul.f32 -0.5, %v386
        %v400 = vadd.f32 %v399, 1.0
        %v401 = vmul.f32 %v400, %v386
        %v402 = vand.u32 2147483647, %v386
        %vm403 = vcmp.lt.f32.partialorder %v402, 0.0004427343
        %v404 = vsel %vm403, %v401, %v398
        %v405 = vadd.f32 %v384, 1.0
        %v406 = vadd.f32 %v386, 1.0
        %v407 = vrcp.pop %v405
        %v408 = vmul.f32 1.0, %v407
        %v409 = vrcp.pop %v406
        %v410 = vmul.f32 1.0, %v409
        %vm411 = vcmp.ge.f32.partialorder %v361, 0.0
        %vm412 = vcmp.ge.f32.partialorder %v362, 0.0
        %v413 = vmul.f32 %v384, %v408
        %v414 = vmul.f32 %v386, %v410
        %v415 = vsel %vm411, %v408, %v413
        %v416 = vsel %vm412, %v410, %v414
        %v417 = vsub.f32 1.0, %v415
        %v418 = vsub.f32 1.0, %v416
        %v419 = vmax.f32 %v361, 0.0
        %v420 = vmax.f32 %v362, 0.0
        %v421 = vsub.f32 %v419, %v361
        %v422 = vsub.f32 %v420, %v362
        %v423 = vadd.f32 %v421, %v395
        %v424 = vadd.f32 %v422, %v404
        %v425 = vadd.f32 %v419, %v395
        %v426 = vadd.f32 %v420, %v404
        %v427 = vmul.f32 %v417, %v417
        %v428 = vmul.f32 %v418, %v418
        %v429 = vmul.f32 %v427, %v423
        %v430 = vmul.f32 %v428, %v424
        %v431 = vmul.f32 %v429, 0.25
        %v432 = vmul.f32 %v430, 0.25
        %v433 = vmul.f32 %v415, %v415
        %v434 = vmul.f32 %v416, %v416
        %v435 = vmul.f32 %v433, %v425
        %v436 = vmul.f32 %v434, %v426
        %v437 = vmul.f32 %v435, 0.75
        %v438 = vmul.f32 %v436, 0.75
        %v439 = vsub.f32 %v431, %v437
        %v440 = vsub.f32 %v432, %v438
        %v441 = vpack.c.bf16 %v415, %v439
        %v442 = vpack.c.bf16 %v416, %v440
        %v443 = vpack.c.bf16 1.0, 1.0
        %v444 = vld [vmem:[#allocation2] sm:$0xff]
        %v445 = vld [vmem:[#allocation2 + $0x8] sm:$0xff]
        %v446 = vld [vmem:[#allocation2 + $0x10] sm:$0x1]
        %v463 = vunpack.c.l.b16 %v363
        %v464 = vunpack.c.h.b16 %v363
        %v465 = vunpack.c.l.b16 %v364
        %v466 = vunpack.c.h.b16 %v364
        %v467 = vunpack.c.l.b16 %v365
        %v468 = vunpack.c.h.b16 %v365
        %v469 = vunpack.c.l.b16 %v366
        %v470 = vunpack.c.h.b16 %v366
        %v471 = vunpack.c.l.b16 %v367
        %v472 = vunpack.c.h.b16 %v367
        %v473 = vunpack.c.l.b16 %v368
        %v474 = vunpack.c.h.b16 %v368
        %v475 = vunpack.c.l.b16 %v369
        %v476 = vunpack.c.h.b16 %v369
        %v477 = vunpack.c.l.b16 %v370
        %v478 = vunpack.c.h.b16 %v370
        %v479 = vunpack.c.l.b16 %v371
        %v480 = vunpack.c.h.b16 %v371
        %v481 = vunpack.c.l.b16 %v372
        %v482 = vunpack.c.h.b16 %v372
        %v483 = vunpack.c.l.b16 %v373
        %v484 = vunpack.c.h.b16 %v373
        %v485 = vunpack.c.l.b16 %v374
        %v486 = vunpack.c.h.b16 %v374
        %v487 = vunpack.c.l.b16 %v375
        %v488 = vunpack.c.h.b16 %v375
        %v489 = vunpack.c.l.b16 %v376
        %v490 = vunpack.c.h.b16 %v376
        %v491 = vunpack.c.l.b16 %v377
        %v492 = vunpack.c.h.b16 %v377
        %v493 = vunpack.c.l.b16 %v378
        %v494 = vunpack.c.h.b16 %v378
        %v495 = vpack.c.b16 %v465, %v463
        %v496 = vpack.c.b16 %v466, %v464
        %v497 = vpack.c.b16 %v469, %v467
        %v498 = vpack.c.b16 %v470, %v468
        %v499 = vpack.c.b16 %v473, %v471
        %v500 = vpack.c.b16 %v474, %v472
        %v501 = vpack.c.b16 %v477, %v475
        %v502 = vpack.c.b16 %v478, %v476
        %v503 = vpack.c.b16 %v481, %v479
        %v504 = vpack.c.b16 %v482, %v480
        %v505 = vpack.c.b16 %v485, %v483
        %v506 = vpack.c.b16 %v486, %v484
        %v507 = vpack.c.b16 %v489, %v487
        %v508 = vpack.c.b16 %v490, %v488
        %v509 = vpack.c.b16 %v493, %v491
        %v510 = vpack.c.b16 %v494, %v492
        %527 = vmatprep.subr.bf16.mxu0 %v496
        %528 = vmatpush1.bf16.xpose.msra.mxu0 %v495
        %529 = vmatprep.subr.bf16.mxu0 %v498
        %530 = vmatpush1.bf16.xpose.msra.mxu0 %v497
        %531 = vmatprep.subr.bf16.mxu0 %v500
        %532 = vmatpush1.bf16.xpose.msra.mxu0 %v499
        %533 = vmatprep.subr.bf16.mxu0 %v502
        %534 = vmatpush1.bf16.xpose.msra.mxu0 %v501
        %535 = vmatprep.subr.bf16.mxu0 %v504
        %536 = vmatpush1.bf16.xpose.msra.mxu0 %v503
        %537 = vmatprep.subr.bf16.mxu0 %v506
        %538 = vmatpush1.bf16.xpose.msra.mxu0 %v505
        %539 = vmatprep.subr.bf16.mxu0 %v508
        %540 = vmatpush1.bf16.xpose.msra.mxu0 %v507
        %541 = vmatprep.subr.bf16.mxu0 %v510
        %542 = vmatpush1.bf16.xpose.msra.mxu0 %v509
        %543 = vmatprep.subr.bf16.mxu0 0
        %544 = vmatpush1.bf16.xpose.msra.mxu0 0
        %545 = vmatprep.subr.bf16.mxu0 0
        %546 = vmatpush1.bf16.xpose.msra.mxu0 0
        %547 = vmatprep.subr.bf16.mxu0 0
        %548 = vmatpush1.bf16.xpose.msra.mxu0 0
        %549 = vmatprep.subr.bf16.mxu0 0
        %550 = vmatpush1.bf16.xpose.msra.mxu0 0
        %551 = vmatprep.subr.bf16.mxu0 0
        %552 = vmatpush1.bf16.xpose.msra.mxu0 0
        %553 = vmatprep.subr.bf16.mxu0 0
        %554 = vmatpush1.bf16.xpose.msra.mxu0 0
        %555 = vmatprep.subr.bf16.mxu0 0
        %556 = vmatpush1.bf16.xpose.msra.mxu0 0
        %557 = vmatprep.subr.bf16.mxu0 0
        %558 = vmatpush1.bf16.xpose.msra.mxu0 0
        %559 = vmatprep.mubr.bf16.mxu0 %v442
        %560 = vmatmul.mubr.bf16.gmra.mrb[0].mxu0 %v441
        %v561 = vpop.f32.mrb[0].mxu0
        %v562 = vadd.f32 0.0, %v561
        %v563 = vpop.f32.mrb[0].mxu0
        %v564 = vpop.f32.mrb[0].mxu0
        %v565 = vadd.f32 0.0, %v564
        %v566 = vpop.f32.mrb[0].mxu0
        %567 = vmatprep.mubr.bf16.mxu0 %v443
        %568 = vmatmul.mubr.bf16.gmra.mrb[0].mxu0 %v443
        %v569 = vpop.f32.mrb[0].mxu0
        %v570 = vadd.f32 0.0, %v569
        %v571 = vpop.f32.mrb[0].mxu0
        %v572 = vpop.f32.mrb[0].mxu0
        %v573 = vpop.f32.mrb[0].mxu0
        %574 = vdwg.mxu0
        %v575 = vadd.f32 %v444, %v562
        %v576 = vadd.f32 %v445, %v565
        %v577 = vadd.f32 %v446, %v570
        %578 = vst [vmem:[#allocation2] sm:$0xff] %v575
        %579 = vst [vmem:[#allocation2 + $0x8] sm:$0xff] %v576
        %580 = vst [vmem:[#allocation2 + $0x10] sm:$0x1] %v577
        %v581 = vld [vmem:[#allocation3] sm:$0xff]
        %v582 = vadd.f32 %v437, %v438
        %583 = vadd.xlane.f32.xlu0 %v582
        %v584 = vpop.xlane.xlu0 %583
        %v585 = vadd.f32 %v581, %v584
        %vm586 = vcmask 7168
        %587 = vst.msk [vmem:[#allocation3] sm:$0xff] %vm586, %v585
        %v588 = vld [vmem:[#allocation4] sm:$0xff]
        %v589 = vadd.f32 %v415, %v416
        %590 = vadd.xlane.f32.xlu0 %v589
        %v591 = vpop.xlane.xlu0 %590
        %v592 = vadd.f32 %v588, %v591
        %593 = vst.msk [vmem:[#allocation4] sm:$0xff] %vm586, %v592
        // Predicated region
        $region57: #{tpu_custom_call.1} parent=35 // pred_check
          %p594 = pneg %p351
        $region58: #{tpu_custom_call.1} parent=35 // pred_check_branch
          %596 = sbr.rel (%p594) target = $region60
        $region59: #{tpu_custom_call.1} parent=35 // pred_region
          %v597 = vld [vmem:[#allocation2] sm:$0xff]
          %v598 = vld [vmem:[#allocation2 + $0x8] sm:$0xff]
          %v599 = vld [vmem:[#allocation2 + $0x10] sm:$0x1]
          %v600 = vld [vmem:[#allocation3] sm:$0xff]
          %602 = vset.pattern.permute.xlu0 0
          %603 = vperm.xlu0 %602, %v600
          %v604 = vpop.permute.xlu0 %603
          %v606 = vadd.f32 %v597, %v604
          %v607 = vrcp.pop 256.0
          %v608 = vmul.f32 %v606, %v607
          %v609 = vmul.f32 %v598, 2.0
          %v610 = vld [vmem:[#allocation4] sm:$0xff]
          %612 = vset.pattern.permute.xlu0 0
          %613 = vperm.xlu0 %612, %v610
          %v614 = vpop.permute.xlu0 %613
          %v616 = vlaneseq
          %v617 = vshrl.u32 %v616, 7
          %v618 = vsub.s32 0, %v617
          %v619 = vrot.slane %v599, %v618
          %v620 = vadd.f32 %v614, %v619
          %v621 = vadd.f32 %v609, 1.0
          %v622 = vadd.f32 %v620, 1.0
          %v623 = vrcp.pop %v622
          %v624 = vmul.f32 %v621, %v623
          %v625 = vsub.f32 1.0, %v624
          %v626 = vld [vmem:[%s299] sm:$0xff]
          %v627 = vld [vmem:[%s308] sm:$0xff]
          %v628 = vld [vmem:[%s308 + $0x8] sm:$0xff]
          %v629 = vld [vmem:[%s308 + $0x10] sm:$0xff]
          %v630 = vld [vmem:[%s308 + $0x18] sm:$0xff]
          %v631 = vmul.f32 %v626, %v626
          %vm632 = vcmask 261120
          %v633 = vsel %vm632, %v631, 0.0
          %634 = vadd.xlane.f32.xlu0 %v633
          %v635 = vpop.xlane.xlu0 %634
          %v636 = vrsqrt.pop %v635
          %v637 = vmul.f32 %v635, %v636
          %vm638 = vcmp.eq.f32.partialorder %v635, inf
          %v639 = vsel %vm638, %v635, %v637
          %vm640 = vcmp.eq.f32.partialorder %v635, 0.0
          %v641 = vand.u32 %v635, 2147483648
          %v642 = vsel %vm640, %v641, %v639
          %v643 = vmax.f32 %v642, 1e-08
          %v644 = vrcp.pop %v643
          %v645 = vmul.f32 1.0, %v644
          %v646 = vmul.f32 %v627, %v627
          %v647 = vmul.f32 %v628, %v628
          %v648 = vmul.f32 %v629, %v629
          %v649 = vmul.f32 %v630, %v630
          %v650 = vadd.f32 %v646, %v647
          %v651 = vadd.f32 %v650, %v648
          %v652 = vadd.f32 %v651, %v649
          %v653 = vrot.slane %v652, 4
          %v654 = vadd.f32 %v652, %v653
          %v655 = vrot.slane %v654, 2
          %v656 = vadd.f32 %v654, %v655
          %v657 = vrot.slane %v656, 1
          %v658 = vadd.f32 %v656, %v657
          %v659 = vrsqrt.pop %v658
          %v660 = vmul.f32 %v658, %v659
          %vm661 = vcmp.eq.f32.partialorder %v658, inf
          %v662 = vsel %vm661, %v658, %v660
          %vm663 = vcmp.eq.f32.partialorder %v658, 0.0
          %v664 = vand.u32 %v658, 2147483648
          %v665 = vsel %vm663, %v664, %v662
          %v666 = vmax.f32 %v665, 1e-08
          %v667 = vrcp.pop %v666
          %v668 = vmul.f32 1.0, %v667
          %v669 = vmul.f32 %v626, %v645
          %v670 = vmul.f32 %v627, %v668
          %v671 = vmul.f32 %v628, %v668
          %v672 = vmul.f32 %v629, %v668
          %v673 = vmul.f32 %v630, %v668
          %v675 = vsel %vm632, %v669, 0
          %677 = vmatprep.subr.mxu0 0.0
          %678 = vmatpush1.msra.mxu0 %v670
          %679 = vmatprep.subr.mxu0 0.0
          %680 = vmatpush1.msra.mxu0 %v671
          %681 = vmatprep.subr.mxu0 0.0
          %682 = vmatpush1.msra.mxu0 %v672
          %683 = vmatprep.subr.mxu0 0.0
          %684 = vmatpush1.msra.mxu0 %v673
          %685 = vmatprep.subr.mxu0 0.0
          %686 = vmatpush1.msra.mxu0 0.0
          %687 = vmatprep.subr.mxu0 0.0
          %688 = vmatpush1.msra.mxu0 0.0
          %689 = vmatprep.subr.mxu0 0.0
          %690 = vmatpush1.msra.mxu0 0.0
          %691 = vmatprep.subr.mxu0 0.0
          %692 = vmatpush1.msra.mxu0 0.0
          %693 = vmatprep.subr.mxu0 0.0
          %694 = vmatpush1.msra.mxu0 0.0
          %695 = vmatprep.subr.mxu0 0.0
          %696 = vmatpush1.msra.mxu0 0.0
          %697 = vmatprep.subr.mxu0 0.0
          %698 = vmatpush1.msra.mxu0 0.0
          %699 = vmatprep.subr.mxu0 0.0
          %700 = vmatpush1.msra.mxu0 0.0
          %701 = vmatprep.subr.mxu0 0.0
          %702 = vmatpush1.msra.mxu0 0.0
          %703 = vmatprep.subr.mxu0 0.0
          %704 = vmatpush1.msra.mxu0 0.0
          %705 = vmatprep.subr.mxu0 0.0
          %706 = vmatpush1.msra.mxu0 0.0
          %707 = vmatprep.subr.mxu0 0.0
          %708 = vmatpush1.msra.mxu0 0.0
          %709 = vmatprep.subr.mxu0 0.0
          %710 = vmatpush1.msra.mxu0 0.0
          %711 = vmatprep.subr.mxu0 0.0
          %712 = vmatpush1.msra.mxu0 0.0
          %713 = vmatprep.subr.mxu0 0.0
          %714 = vmatpush1.msra.mxu0 0.0
          %715 = vmatprep.subr.mxu0 0.0
          %716 = vmatpush1.msra.mxu0 0.0
          %717 = vmatprep.subr.mxu0 0.0
          %718 = vmatpush1.msra.mxu0 0.0
          %719 = vmatprep.subr.mxu0 0.0
          %720 = vmatpush1.msra.mxu0 0.0
          %721 = vmatprep.subr.mxu0 0.0
          %722 = vmatpush1.msra.mxu0 0.0
          %723 = vmatprep.subr.mxu0 0.0
          %724 = vmatpush1.msra.mxu0 0.0
          %725 = vmatprep.subr.mxu0 0.0
          %726 = vmatpush1.msra.mxu0 0.0
          %727 = vmatprep.subr.mxu0 0.0
          %728 = vmatpush1.msra.mxu0 0.0
          %729 = vmatprep.subr.mxu0 0.0
          %730 = vmatpush1.msra.mxu0 0.0
          %731 = vmatprep.subr.mxu0 0.0
          %732 = vmatpush1.msra.mxu0 0.0
          %733 = vmatprep.subr.mxu0 0.0
          %734 = vmatpush1.msra.mxu0 0.0
          %735 = vmatprep.subr.mxu0 0.0
          %736 = vmatpush1.msra.mxu0 0.0
          %737 = vmatprep.subr.mxu0 0.0
          %738 = vmatpush1.msra.mxu0 0.0
          %739 = vmatprep.subr.mxu0 0.0
          %740 = vmatpush1.msra.mxu0 0.0
          %741 = vmatprep.mubr.f32.mxu0 0.0
          %742 = vmatmul.mubr.f32.gmra.mrb[0].mxu0 %v675
          %v743 = vpop.f32.mrb[0].mxu0
          %v744 = vadd.f32 0.0, %v743
          %v745 = vpop.f32.mrb[0].mxu0
          %746 = vdwg.mxu0
          %v747 = vlaneseq
          %v748 = vshrl.u32 %v747, 7
          %v749 = vsub.s32 0, %v748
          %v750 = vrot.slane %v626, %v749
          %752 = vbcast.lane.b32.xlu0 %v750, 256
          %v753 = vpop.permute.xlu0 %752
          %s755 = sor.u32 256, 8
          %756 = vbcast.lane.b32.xlu0 %v750, %s755
          %v757 = vpop.permute.xlu0 %756
          %s759 = sor.u32 256, 16
          %760 = vbcast.lane.b32.xlu0 %v750, %s759
          %v761 = vpop.permute.xlu0 %760
          %s763 = sor.u32 256, 24
          %764 = vbcast.lane.b32.xlu0 %v750, %s763
          %v765 = vpop.permute.xlu0 %764
          %v766 = vlaneseq
          %v767 = vshrl.u32 %v766, 7
          %v768 = vsub.s32 1, %v767
          %v769 = vrot.slane %v626, %v768
          %771 = vbcast.lane.b32.xlu0 %v769, 256
          %v772 = vpop.permute.xlu0 %771
          %s774 = sor.u32 256, 8
          %775 = vbcast.lane.b32.xlu0 %v769, %s774
          %v776 = vpop.permute.xlu0 %775
          %s778 = sor.u32 256, 16
          %779 = vbcast.lane.b32.xlu0 %v769, %s778
          %v780 = vpop.permute.xlu0 %779
          %s782 = sor.u32 256, 24
          %783 = vbcast.lane.b32.xlu0 %v769, %s782
          %v784 = vpop.permute.xlu0 %783
          %v785 = vlaneseq
          %v786 = vshrl.u32 %v785, 7
          %v787 = vsub.s32 2, %v786
          %v788 = vrot.slane %v626, %v787
          %790 = vbcast.lane.b32.xlu0 %v788, 256
          %v791 = vpop.permute.xlu0 %790
          %s793 = sor.u32 256, 8
          %794 = vbcast.lane.b32.xlu0 %v788, %s793
          %v795 = vpop.permute.xlu0 %794
          %s797 = sor.u32 256, 16
          %798 = vbcast.lane.b32.xlu0 %v788, %s797
          %v799 = vpop.permute.xlu0 %798
          %s801 = sor.u32 256, 24
          %802 = vbcast.lane.b32.xlu0 %v788, %s801
          %v803 = vpop.permute.xlu0 %802
          %v804 = vlaneseq
          %v805 = vshrl.u32 %v804, 7
          %v806 = vsub.s32 3, %v805
          %v807 = vrot.slane %v626, %v806
          %809 = vbcast.lane.b32.xlu0 %v807, 256
          %v810 = vpop.permute.xlu0 %809
          %s812 = sor.u32 256, 8
          %813 = vbcast.lane.b32.xlu0 %v807, %s812
          %v814 = vpop.permute.xlu0 %813
          %s816 = sor.u32 256, 16
          %817 = vbcast.lane.b32.xlu0 %v807, %s816
          %v818 = vpop.permute.xlu0 %817
          %s820 = sor.u32 256, 24
          %821 = vbcast.lane.b32.xlu0 %v807, %s820
          %v822 = vpop.permute.xlu0 %821
          %v823 = vlaneseq
          %v824 = vshrl.u32 %v823, 7
          %v825 = vsub.s32 4, %v824
          %v826 = vrot.slane %v626, %v825
          %828 = vbcast.lane.b32.xlu0 %v826, 256
          %v829 = vpop.permute.xlu0 %828
          %s831 = sor.u32 256, 8
          %832 = vbcast.lane.b32.xlu0 %v826, %s831
          %v833 = vpop.permute.xlu0 %832
          %s835 = sor.u32 256, 16
          %836 = vbcast.lane.b32.xlu0 %v826, %s835
          %v837 = vpop.permute.xlu0 %836
          %s839 = sor.u32 256, 24
          %840 = vbcast.lane.b32.xlu0 %v826, %s839
          %v841 = vpop.permute.xlu0 %840
          %v842 = vlaneseq
          %v843 = vshrl.u32 %v842, 7
          %v844 = vsub.s32 5, %v843
          %v845 = vrot.slane %v626, %v844
          %847 = vbcast.lane.b32.xlu0 %v845, 256
          %v848 = vpop.permute.xlu0 %847
          %s850 = sor.u32 256, 8
          %851 = vbcast.lane.b32.xlu0 %v845, %s850
          %v852 = vpop.permute.xlu0 %851
          %s854 = sor.u32 256, 16
          %855 = vbcast.lane.b32.xlu0 %v845, %s854
          %v856 = vpop.permute.xlu0 %855
          %s858 = sor.u32 256, 24
          %859 = vbcast.lane.b32.xlu0 %v845, %s858
          %v860 = vpop.permute.xlu0 %859
          %v861 = vlaneseq
          %v862 = vshrl.u32 %v861, 7
          %v863 = vsub.s32 6, %v862
          %v864 = vrot.slane %v626, %v863
          %866 = vbcast.lane.b32.xlu0 %v864, 256
          %v867 = vpop.permute.xlu0 %866
          %s869 = sor.u32 256, 8
          %870 = vbcast.lane.b32.xlu0 %v864, %s869
          %v871 = vpop.permute.xlu0 %870
          %s873 = sor.u32 256, 16
          %874 = vbcast.lane.b32.xlu0 %v864, %s873
          %v875 = vpop.permute.xlu0 %874
          %s877 = sor.u32 256, 24
          %878 = vbcast.lane.b32.xlu0 %v864, %s877
          %v879 = vpop.permute.xlu0 %878
          %v880 = vlaneseq
          %v881 = vshrl.u32 %v880, 7
          %v882 = vsub.s32 7, %v881
          %v883 = vrot.slane %v626, %v882
          %885 = vbcast.lane.b32.xlu0 %v883, 256
          %v886 = vpop.permute.xlu0 %885
          %s888 = sor.u32 256, 8
          %889 = vbcast.lane.b32.xlu0 %v883, %s888
          %v890 = vpop.permute.xlu0 %889
          %s892 = sor.u32 256, 16
          %893 = vbcast.lane.b32.xlu0 %v883, %s892
          %v894 = vpop.permute.xlu0 %893
          %s896 = sor.u32 256, 24
          %897 = vbcast.lane.b32.xlu0 %v883, %s896
          %v898 = vpop.permute.xlu0 %897
          %v899 = vsub.f32 %v753, %v627
          %v900 = vsub.f32 %v757, %v628
          %v901 = vsub.f32 %v761, %v629
          %v902 = vsub.f32 %v765, %v630
          %v903 = vsub.f32 %v772, %v627
          %v904 = vsub.f32 %v776, %v628
          %v905 = vsub.f32 %v780, %v629
          %v906 = vsub.f32 %v784, %v630
          %v907 = vsub.f32 %v791, %v627
          %v908 = vsub.f32 %v795, %v628
          %v909 = vsub.f32 %v799, %v629
          %v910 = vsub.f32 %v803, %v630
          %v911 = vsub.f32 %v810, %v627
          %v912 = vsub.f32 %v814, %v628
          %v913 = vsub.f32 %v818, %v629
          %v914 = vsub.f32 %v822, %v630
          %v915 = vsub.f32 %v829, %v627
          %v916 = vsub.f32 %v833, %v628
          %v917 = vsub.f32 %v837, %v629
          %v918 = vsub.f32 %v841, %v630
          %v919 = vsub.f32 %v848, %v627
          %v920 = vsub.f32 %v852, %v628
          %v921 = vsub.f32 %v856, %v629
          %v922 = vsub.f32 %v860, %v630
          %v923 = vsub.f32 %v867, %v627
          %v924 = vsub.f32 %v871, %v628
          %v925 = vsub.f32 %v875, %v629
          %v926 = vsub.f32 %v879, %v630
          %v927 = vsub.f32 %v886, %v627
          %v928 = vsub.f32 %v890, %v628
          %v929 = vsub.f32 %v894, %v629
          %v930 = vsub.f32 %v898, %v630
          %v931 = vand.u32 2147483647, %v899
          %v932 = vand.u32 2147483647, %v900
          %v933 = vand.u32 2147483647, %v901
          %v934 = vand.u32 2147483647, %v902
          %v935 = vand.u32 2147483647, %v903
          %v936 = vand.u32 2147483647, %v904
          %v937 = vand.u32 2147483647, %v905
          %v938 = vand.u32 2147483647, %v906
          %v939 = vand.u32 2147483647, %v907
          %v940 = vand.u32 2147483647, %v908
          %v941 = vand.u32 2147483647, %v909
          %v942 = vand.u32 2147483647, %v910
          %v943 = vand.u32 2147483647, %v911
          %v944 = vand.u32 2147483647, %v912
          %v945 = vand.u32 2147483647, %v913
          %v946 = vand.u32 2147483647, %v914
          %v947 = vand.u32 2147483647, %v915
          %v948 = vand.u32 2147483647, %v916
          %v949 = vand.u32 2147483647, %v917
          %v950 = vand.u32 2147483647, %v918
          %v951 = vand.u32 2147483647, %v919
          %v952 = vand.u32 2147483647, %v920
          %v953 = vand.u32 2147483647, %v921
          %v954 = vand.u32 2147483647, %v922
          %v955 = vand.u32 2147483647, %v923
          %v956 = vand.u32 2147483647, %v924
          %v957 = vand.u32 2147483647, %v925
          %v958 = vand.u32 2147483647, %v926
          %v959 = vand.u32 2147483647, %v927
          %v960 = vand.u32 2147483647, %v928
          %v961 = vand.u32 2147483647, %v929
          %v962 = vand.u32 2147483647, %v930
          %v963 = vadd.f32 %v931, %v932
          %v964 = vadd.f32 %v963, %v933
          %v965 = vadd.f32 %v964, %v934
          %v966 = vrot.slane %v965, 4
          %v967 = vadd.f32 %v965, %v966
          %v968 = vrot.slane %v967, 2
          %v969 = vadd.f32 %v967, %v968
          %v970 = vrot.slane %v969, 1
          %v971 = vadd.f32 %v969, %v970
          %v972 = vadd.f32 %v935, %v936
          %v973 = vadd.f32 %v972, %v937
          %v974 = vadd.f32 %v973, %v938
          %v975 = vrot.slane %v974, 4
          %v976 = vadd.f32 %v974, %v975
          %v977 = vrot.slane %v976, 2
          %v978 = vadd.f32 %v976, %v977
          %v979 = vrot.slane %v978, 1
          %v980 = vadd.f32 %v978, %v979
          %v981 = vadd.f32 %v939, %v940
          %v982 = vadd.f32 %v981, %v941
          %v983 = vadd.f32 %v982, %v942
          %v984 = vrot.slane %v983, 4
          %v985 = vadd.f32 %v983, %v984
          %v986 = vrot.slane %v985, 2
          %v987 = vadd.f32 %v985, %v986
          %v988 = vrot.slane %v987, 1
          %v989 = vadd.f32 %v987, %v988
          %v990 = vadd.f32 %v943, %v944
          %v991 = vadd.f32 %v990, %v945
          %v992 = vadd.f32 %v991, %v946
          %v993 = vrot.slane %v992, 4
          %v994 = vadd.f32 %v992, %v993
          %v995 = vrot.slane %v994, 2
          %v996 = vadd.f32 %v994, %v995
          %v997 = vrot.slane %v996, 1
          %v998 = vadd.f32 %v996, %v997
          %v999 = vadd.f32 %v947, %v948
          %v1000 = vadd.f32 %v999, %v949
          %v1001 = vadd.f32 %v1000, %v950
          %v1002 = vrot.slane %v1001, 4
          %v1003 = vadd.f32 %v1001, %v1002
          %v1004 = vrot.slane %v1003, 2
          %v1005 = vadd.f32 %v1003, %v1004
          %v1006 = vrot.slane %v1005, 1
          %v1007 = vadd.f32 %v1005, %v1006
          %v1008 = vadd.f32 %v951, %v952
          %v1009 = vadd.f32 %v1008, %v953
          %v1010 = vadd.f32 %v1009, %v954
          %v1011 = vrot.slane %v1010, 4
          %v1012 = vadd.f32 %v1010, %v1011
          %v1013 = vrot.slane %v1012, 2
          %v1014 = vadd.f32 %v1012, %v1013
          %v1015 = vrot.slane %v1014, 1
          %v1016 = vadd.f32 %v1014, %v1015
          %v1017 = vadd.f32 %v955, %v956
          %v1018 = vadd.f32 %v1017, %v957
          %v1019 = vadd.f32 %v1018, %v958
          %v1020 = vrot.slane %v1019, 4
          %v1021 = vadd.f32 %v1019, %v1020
          %v1022 = vrot.slane %v1021, 2
          %v1023 = vadd.f32 %v1021, %v1022
          %v1024 = vrot.slane %v1023, 1
          %v1025 = vadd.f32 %v1023, %v1024
          %v1026 = vadd.f32 %v959, %v960
          %v1027 = vadd.f32 %v1026, %v961
          %v1028 = vadd.f32 %v1027, %v962
          %v1029 = vrot.slane %v1028, 4
          %v1030 = vadd.f32 %v1028, %v1029
          %v1031 = vrot.slane %v1030, 2
          %v1032 = vadd.f32 %v1030, %v1031
          %v1033 = vrot.slane %v1032, 1
          %v1034 = vadd.f32 %v1032, %v1033
          %v1035 = vmul.f32 %v971, 0.03125
          %v1036 = vmul.f32 %v980, 0.03125
          %v1037 = vmul.f32 %v989, 0.03125
          %v1038 = vmul.f32 %v998, 0.03125
          %v1039 = vmul.f32 %v1007, 0.03125
          %v1040 = vmul.f32 %v1016, 0.03125
          %v1041 = vmul.f32 %v1025, 0.03125
          %v1042 = vmul.f32 %v1034, 0.03125
          %v1043 = vsub.f32 1.0, %v744
          %vm1052 = vcmask 1041409
          %v1053 = vsel %vm1052, %v1036, %v1035
          %vm1054 = vcmask 1042434
          %v1055 = vsel %vm1054, %v1037, %v1053
          %vm1056 = vcmask 1043459
          %v1057 = vsel %vm1056, %v1038, %v1055
          %vm1058 = vcmask 1044484
          %v1059 = vsel %vm1058, %v1039, %v1057
          %vm1060 = vcmask 1045509
          %v1061 = vsel %vm1060, %v1040, %v1059
          %vm1062 = vcmask 1046534
          %v1063 = vsel %vm1062, %v1041, %v1061
          %vm1064 = vcmask 1047559
          %v1065 = vsel %vm1064, %v1042, %v1063
          %v1067 = vadd.f32 %v1043, %v1065
          %v1068 = vadd.f32 %v608, %v1067
          %v1069 = vmul.f32 %v625, 0.05
          %v1070 = vadd.f32 %v1068, %v1069
          %1071 = vst [vmem:[%s347] sm:$0xff] %v1070
        $region60: #{tpu_custom_call.1} parent=35 // pred_fallthru
          _
        %s1072 = sand.u32 %s155, 1
        %s1073 = scalar_lea.sflag [#allocation7], %s1072
        %s1074 = sand.u32 %s155, 1
        %s1075 = smul.addr %s1074, 8
        %s1076 = scalar_lea.vmem [#allocation13], %s1075
        // Predicated region
        $region61: #{tpu_custom_call.1} parent=35 // pred_check
          %p1077 = pneg %p165
        $region62: #{tpu_custom_call.1} parent=35 // pred_check_branch
          %1079 = sbr.rel (%p1077) target = $region64
        $region63: #{tpu_custom_call.1} parent=35 // pred_region
          %s1081 = ssub.s32 128, 128
          %1082 = vsyncadd %s1073, %s1081
          %s1083 = smul.addr %s31, 128
          %s1084 = scalar_lea.hbm %s4, %s1083
          %s1086 = sshll.u32 %s1076, 4
          %s1087 = int_to_ptr.vmem [resolvable:$true] %s1086
          %1089 = dma.vmem_to_hbm [thread:$0]  %s1087, 128, %s1084, %s1073
        $region64: #{tpu_custom_call.1} parent=35 // pred_fallthru
          _
      $region36: #{tpu_custom_call.1} parent=5 // pred_fallthru
        _
      %p1090 = scmp.le.s32.totalorder 2, %s22
      // Predicated region
      $region65: #{tpu_custom_call.1} parent=5 // pred_check
        %p1091 = pneg %p1090
      $region66: #{tpu_custom_call.1} parent=5 // pred_check_branch
        %1093 = sbr.rel (%p1091) target = $region68
      $region67: #{tpu_custom_call.1} parent=5 // pred_region
        %s1094 = ssub.s32 %s22, 2
        // Predicated region
        $region69: #{tpu_custom_call.1} parent=67 // pred_check
          %p1095 = pneg %p171
        $region70: #{tpu_custom_call.1} parent=67 // pred_check_branch
          %1097 = sbr.rel (%p1095) target = $region72
        $region71: #{tpu_custom_call.1} parent=67 // pred_region
          %s1098 = sand.u32 %s156, 1
          %s1099 = scalar_lea.sflag [#allocation7], %s1098
          %s1100 = sand.u32 %s156, 1
          %s1101 = smul.addr %s1100, 8
          %s1102 = scalar_lea.vmem [#allocation13], %s1101
          %1103 = dma.done %s1099, 128
        $region72: #{tpu_custom_call.1} parent=67 // pred_fallthru
          _
      $region68: #{tpu_custom_call.1} parent=5 // pred_fallthru
        _
    $region6: #{tpu_custom_call.1} parent=1 // loop_footer
      %s26 = sadd.s32 1, %s22
    $region7: #{tpu_custom_call.1} parent=1 // loop_footer_branch
      %21 = sbr.rel target = $region3
    $region8: #{tpu_custom_call.1} parent=1 // loop_exit
      _
    %1104 = vsyncpa [#allocation6], 1
    %s1105 = scalar_lea.sflag [#allocation6], 1
    %1106 = vsyncpa %s1105, 1
    %1107 = vsyncpa [#allocation9], 1
    %s1108 = scalar_lea.sflag [#allocation9], 1
    %1109 = vsyncpa %s1108, 1
    %1110 = vsyncpa [#allocation12], 1
    %s1111 = scalar_lea.sflag [#allocation12], 1
    %1112 = vsyncpa %s1111, 1
    %1113 = vsyncpa [#allocation7], 1
    %s1114 = scalar_lea.sflag [#allocation7], 1
    %1115 = vsyncpa %s1114, 1

</llo_original>
